<compile_context>
chip_gen: v5e
topology: v5e:2x2
jax: 0.10.0
libtpu: 0.0.40
codegen_flags: <defaults>
</compile_context>

<pallas_src>
import functools

import jax
import jax.numpy as jnp
from jax import lax
from jax.experimental import pallas as pl
from jax.experimental.pallas import tpu as pltpu


def _mlp_kernel(x_ref, w1_ref, b1_ref, w2_ref, b2_ref, o_ref,
                *, sub, n_sub, fc1_on_vpu):
    """x_ref: (Cin, tile)  w1: (Chid, Cin)  b1: (Chid, 1)
       w2: (Cout, Chid)    b2: (Cout, 1)    o_ref: (Cout, tile)."""
    chid, cin = w1_ref.shape
    cout = w2_ref.shape[0]

    # Hoist tiny, loop-invariant pieces out of the spatial sub-chunk loop
    # (JAX does not CSE broadcasts; extracts of w1 columns are XLU work).
    w2 = w2_ref[...].astype(jnp.float32)                               # (Cout, Chid)
    b1_b = jnp.broadcast_to(b1_ref[...].astype(jnp.float32), (chid, sub))
    b2_b = jnp.broadcast_to(b2_ref[...].astype(jnp.float32), (cout, sub))
    if fc1_on_vpu:
        w1 = w1_ref[...].astype(jnp.float32)                           # (Chid, Cin)
        w1_cols = [w1[:, c:c + 1] for c in range(cin)]                 # (Chid, 1) each

    def body(i, carry):
        i0 = pl.multiple_of(i * sub, 128)

        if fc1_on_vpu:
            # fc1 on the VPU: unrolled FMAs over tiny K = Cin; h is (Chid, sub)
            # with full 8-sublane utilization.  Channel rows are loaded
            # straight from VMEM (vld slot), not extracted from vregs (XLU).
            h = b1_b
            for c in range(cin):
                xrow = x_ref[pl.ds(c, 1), pl.ds(i0, sub)].astype(jnp.float32)
                h = h + w1_cols[c] * xrow
        else:
            # Larger channel counts: fc1 on the MXU too.
            x = x_ref[:, pl.ds(i0, sub)]
            h = jnp.dot(w1_ref[...], x,
                        preferred_element_type=jnp.float32) + b1_b

        # ReLU6; Dropout(p=0.0) is the identity.
        h = jnp.clip(h, 0.0, 6.0)

        # fc2 on the MXU (vector-extended slot) -> frees the saturated VALU
        # slot and overlaps with the next sub-chunk's VPU fc1.  No downcast
        # of h: operands stay f32, accumulation in f32.
        y = jnp.dot(w2, h, preferred_element_type=jnp.float32) + b2_b

        o_ref[:, pl.ds(i0, sub)] = y.astype(o_ref.dtype)
        return carry

    lax.fori_loop(0, n_sub, body, 0, unroll=True)


def _pick_sub(hw_pad, chid):
    """Inner sub-chunk lane width: <=512 lanes, keeps the f32 hidden tile
    (chid, sub) around <=64 KiB (vreg pressure), and divides hw_pad."""
    cap = (64 * 1024) // (4 * max(chid, 1))
    cap = max(128, min(512, (cap // 128) * 128))
    sub = 128
    s = 128
    while s <= cap:
        if hw_pad % s == 0:
            sub = s
        s += 128
    return sub


def _pick_tile(hw_pad, sub, batch):
    """Spatial BlockSpec tile: largest multiple of `sub` dividing hw_pad,
    capped at 8192 lanes (VMEM is nowhere near binding); then, if the grid
    would collapse to a single program, split it so v7x's two TensorCores
    both get work."""
    tile = sub
    t = sub
    limit = min(hw_pad, 8192)
    while t <= limit:
        if hw_pad % t == 0:
            tile = t
        t += sub
    if batch * (hw_pad // tile) < 2:
        best = None
        t = sub
        while t < tile:
            if hw_pad % t == 0 and (hw_pad // t) >= 2:
                best = t
            t += sub
        if best is not None:
            tile = best
    return tile


@jax.jit
def mlp_forward(x_nchw, w1, b1, w2, b2):
    """x_nchw: (B, Cin, H, W).
    w1: (Chid, Cin), b1: (Chid,), w2: (Cout, Chid), b2: (Cout,)
    (PyTorch Conv2d(k=1) weights with the trailing 1x1 dims squeezed)."""
    B, Cin, H, W = x_nchw.shape
    Chid = w1.shape[0]
    Cout = w2.shape[0]
    HW = H * W

    x3 = x_nchw.reshape(B, Cin, HW)          # free reshape (channel-major)

    # Keep the lane (spatial) axis a multiple of 128 so stores stay unmasked;
    # pads only for awkward H*W and is sliced off afterwards.
    hw_pad = ((HW + 127) // 128) * 128
    if hw_pad != HW:
        x3 = jnp.pad(x3, ((0, 0), (0, 0), (0, hw_pad - HW)))

    b1c = b1.reshape(Chid, 1)
    b2c = b2.reshape(Cout, 1)

    sub = _pick_sub(hw_pad, Chid)
    tile = _pick_tile(hw_pad, sub, B)
    n_sub = tile // sub
    grid = (B, hw_pad // tile)

    fc1_on_vpu = Cin <= 8                    # tiny K: MXU would run ~empty

    kernel = functools.partial(_mlp_kernel, sub=sub, n_sub=n_sub,
                               fc1_on_vpu=fc1_on_vpu)

    out3 = pl.pallas_call(
        kernel,
        out_shape=jax.ShapeDtypeStruct((B, Cout, hw_pad), x_nchw.dtype),
        grid_spec=pltpu.PrefetchScalarGridSpec(
            num_scalar_prefetch=0,
            grid=grid,
            in_specs=[
                # activation tile: batch dim squeezed, spatial on lanes
                pl.BlockSpec((None, Cin, tile), lambda b, j: (b, 0, j)),
                # weights / biases: tiny, fully resident (constant index map)
                pl.BlockSpec((Chid, Cin), lambda b, j: (0, 0)),
                pl.BlockSpec((Chid, 1), lambda b, j: (0, 0)),
                pl.BlockSpec((Cout, Chid), lambda b, j: (0, 0)),
                pl.BlockSpec((Cout, 1), lambda b, j: (0, 0)),
            ],
            out_specs=pl.BlockSpec((None, Cout, tile), lambda b, j: (b, 0, j)),
        ),
        compiler_params=pltpu.CompilerParams(
            dimension_semantics=("parallel", "parallel"),
            vmem_limit_bytes=32 * 1024 * 1024,
        ),
    )(x3, w1, b1c, w2, b2c)

    if hw_pad != HW:
        out3 = out3[:, :, :HW]
    return out3.reshape(B, Cout, H, W)


def mlp_reference(x_nchw, w1, b1, w2, b2):
    """Pure-JAX reference mirroring the PyTorch forward (f32, exact matmuls)."""
    x = x_nchw.astype(jnp.float32)
    h = jnp.einsum("oc,bchw->bohw", w1.astype(jnp.float32), x,
                   precision=jax.lax.Precision.HIGHEST)
    h = h + b1.astype(jnp.float32)[None, :, None, None]
    h = jnp.clip(h, 0.0, 6.0)
    y = jnp.einsum("oc,bchw->bohw", w2.astype(jnp.float32), h,
                   precision=jax.lax.Precision.HIGHEST)
    y = y + b2.astype(jnp.float32)[None, :, None, None]
    return y.astype(x_nchw.dtype)


if __name__ == "__main__":
    key = jax.random.PRNGKey(0)
    k_x, k_w1, k_b1, k_w2, k_b2 = jax.random.split(key, 5)

    B, Cin, H, W = 2, 4, 16, 16
    Chid = 32          # hidden_features
    Cout = Cin         # out_features defaults to in_features

    x = jax.random.normal(k_x, (B, Cin, H, W), dtype=jnp.float32)
    # Conv2d(k=1) weight (Cout, Cin, 1, 1) maps directly to (Cout, Cin).
    w1 = jax.random.normal(k_w1, (Chid, Cin), dtype=jnp.float32) * 0.1
    b1 = jax.random.normal(k_b1, (Chid,), dtype=jnp.float32) * 0.1
    w2 = jax.random.normal(k_w2, (Cout, Chid), dtype=jnp.float32) * 0.1
    b2 = jax.random.normal(k_b2, (Cout,), dtype=jnp.float32) * 0.1

    out = mlp_forward(x, w1, b1, w2, b2)
    out = jax.block_until_ready(out)

    ref = mlp_reference(x, w1, b1, w2, b2)
    assert out.shape == (B, Cout, H, W), out.shape
    # Tolerance covers MXU fc2 internal precision on all TPU generations.
    assert jnp.allclose(out, ref, atol=5e-3, rtol=5e-3), (
        "mismatch vs reference, max abs err = "
        + str(float(jnp.max(jnp.abs(out - ref)))))

    print("KERNEL_OK")
</pallas_src>

<mosaic_0001>
module attributes {stable_mosaic.version = 11 : i64} {
  func.func @_mlp_kernel(%arg0: i32, %arg1: i32, %arg2: memref<1x4x256xf32, #tpu.memory_space<vmem>>, %arg3: memref<32x4xf32, #tpu.memory_space<vmem>>, %arg4: memref<32x1xf32, #tpu.memory_space<vmem>>, %arg5: memref<4x32xf32, #tpu.memory_space<vmem>>, %arg6: memref<4x1xf32, #tpu.memory_space<vmem>>, %arg7: memref<1x4x256xf32, #tpu.memory_space<vmem>>) attributes {dimension_semantics = [#tpu.dimension_semantics<parallel>, #tpu.dimension_semantics<parallel>], iteration_bounds = array<i64: 2, 1>, scalar_prefetch = 0 : i64, scratch_operands = 0 : i64, tpu.core_type = #tpu.core_type<tc>, window_params = [{transform_indices = @transform_0, window_bounds = array<i64: 1, 4, 256>}, {pipeline_mode = #tpu.pipeline_mode<synchronous>, transform_indices = @transform_1, window_bounds = array<i64: 32, 4>}, {pipeline_mode = #tpu.pipeline_mode<synchronous>, transform_indices = @transform_2, window_bounds = array<i64: 32, 1>}, {pipeline_mode = #tpu.pipeline_mode<synchronous>, transform_indices = @transform_3, window_bounds = array<i64: 4, 32>}, {pipeline_mode = #tpu.pipeline_mode<synchronous>, transform_indices = @transform_4, window_bounds = array<i64: 4, 1>}, {transform_indices = @transform_5, window_bounds = array<i64: 1, 4, 256>}]} {
    %c0 = arith.constant 0 : index
    %c0_0 = arith.constant 0 : index
    %0 = vector.load %arg5[%c0, %c0_0] : memref<4x32xf32, #tpu.memory_space<vmem>>, vector<4x32xf32>
    %c0_1 = arith.constant 0 : index
    %c0_2 = arith.constant 0 : index
    %1 = vector.load %arg4[%c0_1, %c0_2] : memref<32x1xf32, #tpu.memory_space<vmem>>, vector<32x1xf32>
    %2 = vector.shape_cast %1 : vector<32x1xf32> to vector<32x1xf32>
    %3 = vector.broadcast %2 : vector<32x1xf32> to vector<32x256xf32>
    %c0_3 = arith.constant 0 : index
    %c0_4 = arith.constant 0 : index
    %4 = vector.load %arg6[%c0_3, %c0_4] : memref<4x1xf32, #tpu.memory_space<vmem>>, vector<4x1xf32>
    %5 = vector.shape_cast %4 : vector<4x1xf32> to vector<4x1xf32>
    %6 = vector.broadcast %5 : vector<4x1xf32> to vector<4x256xf32>
    %c0_5 = arith.constant 0 : index
    %c0_6 = arith.constant 0 : index
    %7 = vector.load %arg3[%c0_5, %c0_6] : memref<32x4xf32, #tpu.memory_space<vmem>>, vector<32x4xf32>
    %8 = vector.extract_strided_slice %7 {offsets = [0, 0], sizes = [32, 1], strides = [1, 1]} : vector<32x4xf32> to vector<32x1xf32>
    %9 = vector.extract_strided_slice %7 {offsets = [0, 1], sizes = [32, 1], strides = [1, 1]} : vector<32x4xf32> to vector<32x1xf32>
    %10 = vector.extract_strided_slice %7 {offsets = [0, 2], sizes = [32, 1], strides = [1, 1]} : vector<32x4xf32> to vector<32x1xf32>
    %11 = vector.extract_strided_slice %7 {offsets = [0, 3], sizes = [32, 1], strides = [1, 1]} : vector<32x4xf32> to vector<32x1xf32>
    %c0_i32 = arith.constant 0 : i32
    %c256_i32 = arith.constant 256 : i32
    %12 = arith.muli %c0_i32, %c256_i32 : i32
    %13 = tpu.assume_multiple %12, 128 : i32
    %c0_7 = arith.constant 0 : index
    %c0_8 = arith.constant 0 : index
    %14 = arith.index_cast %13 : i32 to index
    %15 = vector.load %arg2[%c0_7, %c0_8, %14] : memref<1x4x256xf32, #tpu.memory_space<vmem>>, vector<1x1x256xf32>
    %16 = vector.shape_cast %15 : vector<1x1x256xf32> to vector<1x256xf32>
    %17 = vector.broadcast %8 : vector<32x1xf32> to vector<32x256xf32>
    %18 = vector.broadcast %16 : vector<1x256xf32> to vector<32x256xf32>
    %19 = arith.mulf %17, %18 : vector<32x256xf32>
    %20 = arith.addf %3, %19 : vector<32x256xf32>
    %c0_9 = arith.constant 0 : index
    %c1 = arith.constant 1 : index
    %21 = arith.index_cast %13 : i32 to index
    %22 = vector.load %arg2[%c0_9, %c1, %21] : memref<1x4x256xf32, #tpu.memory_space<vmem>>, vector<1x1x256xf32>
    %23 = vector.shape_cast %22 : vector<1x1x256xf32> to vector<1x256xf32>
    %24 = vector.broadcast %9 : vector<32x1xf32> to vector<32x256xf32>
    %25 = vector.broadcast %23 : vector<1x256xf32> to vector<32x256xf32>
    %26 = arith.mulf %24, %25 : vector<32x256xf32>
    %27 = arith.addf %20, %26 : vector<32x256xf32>
    %c0_10 = arith.constant 0 : index
    %c2 = arith.constant 2 : index
    %28 = arith.index_cast %13 : i32 to index
    %29 = vector.load %arg2[%c0_10, %c2, %28] : memref<1x4x256xf32, #tpu.memory_space<vmem>>, vector<1x1x256xf32>
    %30 = vector.shape_cast %29 : vector<1x1x256xf32> to vector<1x256xf32>
    %31 = vector.broadcast %10 : vector<32x1xf32> to vector<32x256xf32>
    %32 = vector.broadcast %30 : vector<1x256xf32> to vector<32x256xf32>
    %33 = arith.mulf %31, %32 : vector<32x256xf32>
    %34 = arith.addf %27, %33 : vector<32x256xf32>
    %c0_11 = arith.constant 0 : index
    %c3 = arith.constant 3 : index
    %35 = arith.index_cast %13 : i32 to index
    %36 = vector.load %arg2[%c0_11, %c3, %35] : memref<1x4x256xf32, #tpu.memory_space<vmem>>, vector<1x1x256xf32>
    %37 = vector.shape_cast %36 : vector<1x1x256xf32> to vector<1x256xf32>
    %38 = vector.broadcast %11 : vector<32x1xf32> to vector<32x256xf32>
    %39 = vector.broadcast %37 : vector<1x256xf32> to vector<32x256xf32>
    %40 = arith.mulf %38, %39 : vector<32x256xf32>
    %41 = arith.addf %34, %40 : vector<32x256xf32>
    %cst = arith.constant 0.000000e+00 : f32
    %cst_12 = arith.constant 6.000000e+00 : f32
    %42 = vector.broadcast %cst : f32 to vector<32x256xf32>
    %43 = arith.maximumf %42, %41 : vector<32x256xf32>
    %44 = vector.broadcast %cst_12 : f32 to vector<32x256xf32>
    %45 = arith.minimumf %44, %43 : vector<32x256xf32>
    %cst_13 = arith.constant dense<0.000000e+00> : vector<4x256xf32>
    %46 = tpu.matmul %0, %45, %cst_13 {dimension_numbers = #tpu.dot_dimension_numbers<[1], [0], [0], [1], [0, 0, 1, 1], [], []>} : vector<4x32xf32>, vector<32x256xf32>, vector<4x256xf32> -> vector<4x256xf32>
    %47 = arith.addf %46, %6 : vector<4x256xf32>
    %c0_14 = arith.constant 0 : index
    %c0_15 = arith.constant 0 : index
    %48 = arith.index_cast %13 : i32 to index
    %49 = vector.load %arg7[%c0_14, %c0_15, %48] : memref<1x4x256xf32, #tpu.memory_space<vmem>>, vector<1x4x256xf32>
    %50 = vector.shape_cast %49 : vector<1x4x256xf32> to vector<4x256xf32>
    %51 = vector.shape_cast %47 : vector<4x256xf32> to vector<1x4x256xf32>
    tpu.vector_store %arg7[%c0_14, %c0_15, %48], %51 {strides = array<i32>} : memref<1x4x256xf32, #tpu.memory_space<vmem>>, vector<1x4x256xf32>,
    %c1_i32 = arith.constant 1 : i32
    return
  }
  func.func @transform_0(%arg0: i32, %arg1: i32) -> (i32, i32, i32) {
    %c0_i32 = arith.constant 0 : i32
    %c0_i32_0 = arith.constant 0 : i32
    return %arg0, %c0_i32, %arg1 : i32, i32, i32
  }
  func.func @transform_1(%arg0: i32, %arg1: i32) -> (i32, i32) {
    %c0_i32 = arith.constant 0 : i32
    %c0_i32_0 = arith.constant 0 : i32
    %c0_i32_1 = arith.constant 0 : i32
    return %c0_i32, %c0_i32_0 : i32, i32
  }
  func.func @transform_2(%arg0: i32, %arg1: i32) -> (i32, i32) {
    %c0_i32 = arith.constant 0 : i32
    %c0_i32_0 = arith.constant 0 : i32
    %c0_i32_1 = arith.constant 0 : i32
    return %c0_i32, %c0_i32_0 : i32, i32
  }
  func.func @transform_3(%arg0: i32, %arg1: i32) -> (i32, i32) {
    %c0_i32 = arith.constant 0 : i32
    %c0_i32_0 = arith.constant 0 : i32
    %c0_i32_1 = arith.constant 0 : i32
    return %c0_i32, %c0_i32_0 : i32, i32
  }
  func.func @transform_4(%arg0: i32, %arg1: i32) -> (i32, i32) {
    %c0_i32 = arith.constant 0 : i32
    %c0_i32_0 = arith.constant 0 : i32
    %c0_i32_1 = arith.constant 0 : i32
    return %c0_i32, %c0_i32_0 : i32, i32
  }
  func.func @transform_5(%arg0: i32, %arg1: i32) -> (i32, i32, i32) {
    %c0_i32 = arith.constant 0 : i32
    %c0_i32_0 = arith.constant 0 : i32
    return %arg0, %c0_i32, %arg1 : i32, i32, i32
  }
}

</mosaic_0001>

<llo_original>
// kernel: mlp_forward.1
$region0: #{mlp_forward.1}
  #allocation0 [shape = 'u32[]', space=smem, size = 0x4, offset = 0x4, fixed_abs, tag = 'smem constant byte address 0x4 - core index']
  #allocation1 [shape = 'u32[72,128]{1,0:T(1,128)}', space=vmem, size = 0x9000, scoped, tag = 'internal scratch']
  %s0 = inlined_call_operand.vmem [shape: f32[2,4,256], index: 0, kind: input, shape index: {}]
  %s1 = inlined_call_operand.vmem [shape: f32[32,4], index: 1, kind: input, shape index: {}]
  %s2 = inlined_call_operand.vmem [shape: f32[32,1], index: 2, kind: input, shape index: {}]
  %s3 = inlined_call_operand.vmem [shape: f32[4,32], index: 3, kind: input, shape index: {}]
  %s4 = inlined_call_operand.vmem [shape: f32[4,1], index: 4, kind: input, shape index: {}]
  %s5 = inlined_call_operand.vmem [shape: f32[2,4,256], index: 5, kind: output, shape index: {}]
  %s6 = sld [smem:[#allocation0]]
  $region53: #{mlp_forward.1} parent=0
    _
  %s8 = ssub.s32 1, %s6
  %s9 = scalar_select 0, %s8, %s6
  loop: start=0, step=1, limit=4
  $region2: #{mlp_forward.1} parent=0 // loop_pre_header
    _
  $region3: #{mlp_forward.1} parent=0 // loop_header
    %s11 = sphi 0, %s15
    %p12 = scmp.ge.s32.totalorder %s11, 4
    %s18 = sphi 0, %s30
    %s19 = sphi 0, %s26
    %s20 = sphi 0, %s18
    %s21 = sphi 0, %s19
    %s22 = sphi 0, %s20
    %s23 = sphi 0, %s21
    %s35 = sphi 0, %s37
    %s38 = sphi 0, %s35
    %s39 = sphi 0, %s38
    %s55 = sphi 0, %s39
    %s59 = sphi 0, %s59
    %s61 = sphi 0, %s59
    %s62 = sphi 0, %s61
    %s76 = sphi 0, %s62
    %s80 = sphi 0, %s80
    %s82 = sphi 0, %s80
    %s83 = sphi 0, %s82
    %s97 = sphi 0, %s83
    %s101 = sphi 0, %s101
    %s103 = sphi 0, %s101
    %s104 = sphi 0, %s103
    %s118 = sphi 0, %s104
    %s122 = sphi 0, %s122
    %s124 = sphi 0, %s122
    %s125 = sphi 0, %s124
    %s139 = sphi 0, %s125
    %s147 = sphi 0, %s149
    %s150 = sphi 0, %s147
    %s151 = sphi 0, %s150
    %s167 = sphi 0, %s151
  $region4: #{mlp_forward.1} parent=0 // loop_header_branch
    %14 = sbr.rel (%p12) target = $region8
  $region5: #{mlp_forward.1} parent=0 // loop_body
    %s16 = ssub.s32 %s11, 1
    %s17 = ssub.s32 %s11, 2
    %s24 = sadd.s32 1, %s19
    %p25 = scmp.ge.s32.totalorder %s24, 1
    %s26 = scalar_select %p25, 0, %s24
    %s27 = sadd.s32 1, %s18
    %s28 = scalar_select %p25, %s27, %s18
    %p29 = scmp.ge.s32.totalorder %s28, 2
    %s30 = scalar_select %p29, 0, %s28
    %s31 = ssub.s32 %s18, %s30
    %s32 = ssub.s32 %s19, %s26
    %s33 = sor.u32 %s31, %s32
    %p34 = scmp.eq.s32.totalorder %s33, 0
    %s36 = sadd.s32 %s35, 1
    %s37 = scalar_select %p34, %s35, %s36
    %p40 = pneg %p34
    %p41 = scmp.eq.s32.totalorder %s11, 1
    %p42 = por %p40, %p41
    %p43 = scmp.ne.s32.totalorder %s35, %s38
    %p44 = scmp.eq.s32.totalorder %s11, 0
    %p45 = por %p43, %p44
    %p46 = scmp.ne.s32.totalorder %s35, %s38
    %p47 = scmp.eq.s32.totalorder %s16, 1
    %p48 = por %p46, %p47
    %p49 = scmp.ne.s32.totalorder %s38, %s39
    %p50 = scmp.eq.s32.totalorder %s16, 0
    %p51 = por %p49, %p50
    %p52 = scmp.ne.s32.totalorder %s38, %s39
    %p53 = scmp.eq.s32.totalorder %s17, 1
    %p54 = por %p52, %p53
    %p56 = scmp.ne.s32.totalorder %s39, %s55
    %p57 = scmp.eq.s32.totalorder %s17, 0
    %p58 = por %p56, %p57
    %s60 = sadd.s32 %s59, 1
    %p63 = scmp.eq.s32.totalorder %s11, 1
    %p64 = scmp.ne.s32.totalorder %s59, %s61
    %p65 = scmp.eq.s32.totalorder %s11, 0
    %p66 = por %p64, %p65
    %p67 = scmp.ne.s32.totalorder %s59, %s61
    %p68 = scmp.eq.s32.totalorder %s16, 1
    %p69 = por %p67, %p68
    %p70 = scmp.ne.s32.totalorder %s61, %s62
    %p71 = scmp.eq.s32.totalorder %s16, 0
    %p72 = por %p70, %p71
    %p73 = scmp.ne.s32.totalorder %s61, %s62
    %p74 = scmp.eq.s32.totalorder %s17, 1
    %p75 = por %p73, %p74
    %p77 = scmp.ne.s32.totalorder %s62, %s76
    %p78 = scmp.eq.s32.totalorder %s17, 0
    %p79 = por %p77, %p78
    %s81 = sadd.s32 %s80, 1
    %p84 = scmp.eq.s32.totalorder %s11, 1
    %p85 = scmp.ne.s32.totalorder %s80, %s82
    %p86 = scmp.eq.s32.totalorder %s11, 0
    %p87 = por %p85, %p86
    %p88 = scmp.ne.s32.totalorder %s80, %s82
    %p89 = scmp.eq.s32.totalorder %s16, 1
    %p90 = por %p88, %p89
    %p91 = scmp.ne.s32.totalorder %s82, %s83
    %p92 = scmp.eq.s32.totalorder %s16, 0
    %p93 = por %p91, %p92
    %p94 = scmp.ne.s32.totalorder %s82, %s83
    %p95 = scmp.eq.s32.totalorder %s17, 1
    %p96 = por %p94, %p95
    %p98 = scmp.ne.s32.totalorder %s83, %s97
    %p99 = scmp.eq.s32.totalorder %s17, 0
    %p100 = por %p98, %p99
    %s102 = sadd.s32 %s101, 1
    %p105 = scmp.eq.s32.totalorder %s11, 1
    %p106 = scmp.ne.s32.totalorder %s101, %s103
    %p107 = scmp.eq.s32.totalorder %s11, 0
    %p108 = por %p106, %p107
    %p109 = scmp.ne.s32.totalorder %s101, %s103
    %p110 = scmp.eq.s32.totalorder %s16, 1
    %p111 = por %p109, %p110
    %p112 = scmp.ne.s32.totalorder %s103, %s104
    %p113 = scmp.eq.s32.totalorder %s16, 0
    %p114 = por %p112, %p113
    %p115 = scmp.ne.s32.totalorder %s103, %s104
    %p116 = scmp.eq.s32.totalorder %s17, 1
    %p117 = por %p115, %p116
    %p119 = scmp.ne.s32.totalorder %s104, %s118
    %p120 = scmp.eq.s32.totalorder %s17, 0
    %p121 = por %p119, %p120
    %s123 = sadd.s32 %s122, 1
    %p126 = scmp.eq.s32.totalorder %s11, 1
    %p127 = scmp.ne.s32.totalorder %s122, %s124
    %p128 = scmp.eq.s32.totalorder %s11, 0
    %p129 = por %p127, %p128
    %p130 = scmp.ne.s32.totalorder %s122, %s124
    %p131 = scmp.eq.s32.totalorder %s16, 1
    %p132 = por %p130, %p131
    %p133 = scmp.ne.s32.totalorder %s124, %s125
    %p134 = scmp.eq.s32.totalorder %s16, 0
    %p135 = por %p133, %p134
    %p136 = scmp.ne.s32.totalorder %s124, %s125
    %p137 = scmp.eq.s32.totalorder %s17, 1
    %p138 = por %p136, %p137
    %p140 = scmp.ne.s32.totalorder %s125, %s139
    %p141 = scmp.eq.s32.totalorder %s17, 0
    %p142 = por %p140, %p141
    %s143 = ssub.s32 %s18, %s30
    %s144 = ssub.s32 %s19, %s26
    %s145 = sor.u32 %s143, %s144
    %p146 = scmp.eq.s32.totalorder %s145, 0
    %s148 = sadd.s32 %s147, 1
    %s149 = scalar_select %p146, %s147, %s148
    %p152 = pneg %p146
    %p153 = scmp.eq.s32.totalorder %s11, 1
    %p154 = por %p152, %p153
    %p155 = scmp.ne.s32.totalorder %s147, %s150
    %p156 = scmp.eq.s32.totalorder %s11, 0
    %p157 = por %p155, %p156
    %p158 = scmp.ne.s32.totalorder %s147, %s150
    %p159 = scmp.eq.s32.totalorder %s16, 1
    %p160 = por %p158, %p159
    %p161 = scmp.ne.s32.totalorder %s150, %s151
    %p162 = scmp.eq.s32.totalorder %s16, 0
    %p163 = por %p161, %p162
    %p164 = scmp.ne.s32.totalorder %s150, %s151
    %p165 = scmp.eq.s32.totalorder %s17, 1
    %p166 = por %p164, %p165
    %p168 = scmp.ne.s32.totalorder %s151, %s167
    %p169 = scmp.eq.s32.totalorder %s17, 0
    %p170 = por %p168, %p169
    %p171 = scmp.le.s32.totalorder 1, %s11
    %p172 = scmp.lt.s32.totalorder %s11, 3
    %p173 = pnand %p171, %p172
    %p174 = pneg %p173
    // Predicated region
    $region9: #{mlp_forward.1} parent=5 // pred_check
      _
    $region10: #{mlp_forward.1} parent=5 // pred_check_branch
      %176 = sbr.rel (%p173) target = $region12
    $region11: #{mlp_forward.1} parent=5 // pred_region
      %s177 = ssub.s32 %s11, 1
      // Predicated region
      $region13: #{mlp_forward.1} parent=11 // pred_check
        %p178 = pneg %p72
      $region14: #{mlp_forward.1} parent=11 // pred_check_branch
        %180 = sbr.rel (%p178) target = $region16
      $region15: #{mlp_forward.1} parent=11 // pred_region
        _
      $region16: #{mlp_forward.1} parent=11 // pred_fallthru
        _
      // Predicated region
      $region17: #{mlp_forward.1} parent=11 // pred_check
        %p181 = pneg %p93
      $region18: #{mlp_forward.1} parent=11 // pred_check_branch
        %183 = sbr.rel (%p181) target = $region20
      $region19: #{mlp_forward.1} parent=11 // pred_region
        _
      $region20: #{mlp_forward.1} parent=11 // pred_fallthru
        _
      // Predicated region
      $region21: #{mlp_forward.1} parent=11 // pred_check
        %p184 = pneg %p114
      $region22: #{mlp_forward.1} parent=11 // pred_check_branch
        %186 = sbr.rel (%p184) target = $region24
      $region23: #{mlp_forward.1} parent=11 // pred_region
        _
      $region24: #{mlp_forward.1} parent=11 // pred_fallthru
        _
      // Predicated region
      $region25: #{mlp_forward.1} parent=11 // pred_check
        %p187 = pneg %p135
      $region26: #{mlp_forward.1} parent=11 // pred_check_branch
        %189 = sbr.rel (%p187) target = $region28
      $region27: #{mlp_forward.1} parent=11 // pred_region
        _
      $region28: #{mlp_forward.1} parent=11 // pred_fallthru
        _
    $region12: #{mlp_forward.1} parent=5 // pred_fallthru
      _
    %p190 = scmp.lt.s32.totalorder %s11, 2
    // Predicated region
    $region29: #{mlp_forward.1} parent=5 // pred_check
      %p191 = pneg %p190
    $region30: #{mlp_forward.1} parent=5 // pred_check_branch
      %193 = sbr.rel (%p191) target = $region32
    $region31: #{mlp_forward.1} parent=5 // pred_region
      // Predicated region
      $region33: #{mlp_forward.1} parent=31 // pred_check
        %p194 = pneg %p45
      $region34: #{mlp_forward.1} parent=31 // pred_check_branch
        %196 = sbr.rel (%p194) target = $region36
      $region35: #{mlp_forward.1} parent=31 // pred_region
        %s197 = smul.u32 2, %s19
        %p198 = scmp.lt.s32.totalorder %s18, 1
        %s199 = scalar_select %p198, %s18, 1
        %p200 = scmp.lt.s32.totalorder %s197, 1
        %s201 = scalar_select %p200, %s197, 1
        %s202 = smul.addr %s199, 2
        %s203 = sadd.s32 %s201, %s202
        %s204 = smul.addr %s203, 4
        %s205 = scalar_lea.vmem %s0, %s204
        %s206 = smul.u32 2, %s19
      $region36: #{mlp_forward.1} parent=31 // pred_fallthru
        _
    $region32: #{mlp_forward.1} parent=5 // pred_fallthru
      _
    %p207 = scmp.le.s32.totalorder 1, %s11
    %p208 = scmp.lt.s32.totalorder %s11, 3
    %p209 = pnand %p207, %p208
    %p210 = pneg %p209
    // Predicated region
    $region37: #{mlp_forward.1} parent=5 // pred_check
      _
    $region38: #{mlp_forward.1} parent=5 // pred_check_branch
      %212 = sbr.rel (%p209) target = $region40
    $region39: #{mlp_forward.1} parent=5 // pred_region
      %s213 = ssub.s32 %s11, 1
      %s214 = smul.u32 2, %s21
      %p215 = scmp.lt.s32.totalorder %s20, 1
      %s216 = scalar_select %p215, %s20, 1
      %p217 = scmp.lt.s32.totalorder %s214, 1
      %s218 = scalar_select %p217, %s214, 1
      %s219 = smul.addr %s216, 2
      %s220 = sadd.s32 %s218, %s219
      %s221 = smul.addr %s220, 4
      %s222 = scalar_lea.vmem %s0, %s221
      %p223 = pneg %p51
      %p224 = pneg %p48
      %p225 = pneg %p72
      %p226 = pneg %p69
      %p227 = pneg %p93
      %p228 = pneg %p90
      %p229 = pneg %p114
      %p230 = pneg %p111
      %p231 = pneg %p135
      %p232 = pneg %p132
      %p233 = pneg %p163
      %p234 = pneg %p160
      %s235 = smul.u32 2, %s21
      %p236 = scmp.lt.s32.totalorder %s20, 1
      %s237 = scalar_select %p236, %s20, 1
      %p238 = scmp.lt.s32.totalorder %s235, 1
      %s239 = scalar_select %p238, %s235, 1
      %s240 = smul.addr %s237, 2
      %s241 = sadd.s32 %s239, %s240
      %s242 = smul.addr %s241, 4
      %s243 = scalar_lea.vmem %s5, %s242
      %s244 = smul.u32 2, %s21
      %p245 = scmp.lt.s32.totalorder %s20, 1
      %s246 = scalar_select %p245, %s20, 1
      %p247 = scmp.lt.s32.totalorder %s244, 1
      %s248 = scalar_select %p247, %s244, 1
      %s249 = smul.addr %s246, 2
      %s250 = sadd.s32 %s248, %s249
      %s251 = smul.addr %s250, 4
      %s252 = scalar_lea.vmem %s0, %s251
      %s253 = smul.u32 2, %s21
      %s254 = smul.u32 2, %s21
      %p255 = scmp.lt.s32.totalorder %s20, 1
      %s256 = scalar_select %p255, %s20, 1
      %p257 = scmp.lt.s32.totalorder %s254, 1
      %s258 = scalar_select %p257, %s254, 1
      %s259 = smul.addr %s256, 2
      %s260 = sadd.s32 %s258, %s259
      %s261 = smul.addr %s260, 4
      %s262 = scalar_lea.vmem %s5, %s261
      %s263 = smul.u32 2, %s21
      %v264 = vld [vmem:[%s3] sm:$0xf]
      %v265 = vld [vmem:[%s2] sm:$0xff]
      %v266 = vld [vmem:[%s2 + $0x8] sm:$0xff]
      %v267 = vld [vmem:[%s2 + $0x10] sm:$0xff]
      %v268 = vld [vmem:[%s2 + $0x18] sm:$0xff]
      %270 = vset.pattern.permute.xlu0 0
      %271 = vperm.xlu0 %270, %v265
      %v272 = vpop.permute.xlu0 %271
      %275 = vset.pattern.permute.xlu0 0
      %276 = vperm.xlu0 %275, %v266
      %v277 = vpop.permute.xlu0 %276
      %280 = vset.pattern.permute.xlu0 0
      %281 = vperm.xlu0 %280, %v267
      %v282 = vpop.permute.xlu0 %281
      %285 = vset.pattern.permute.xlu0 0
      %286 = vperm.xlu0 %285, %v268
      %v287 = vpop.permute.xlu0 %286
      %v289 = vld [vmem:[%s4] sm:$0xf]
      %291 = vset.pattern.permute.xlu0 0
      %292 = vperm.xlu0 %291, %v289
      %v293 = vpop.permute.xlu0 %292
      %v295 = vld [vmem:[%s1] sm:$0xff]
      %v296 = vld [vmem:[%s1 + $0x8] sm:$0xff]
      %v297 = vld [vmem:[%s1 + $0x10] sm:$0xff]
      %v298 = vld [vmem:[%s1 + $0x18] sm:$0xff]
      %v299 = vld [vmem:[%s252] ss:$4 sm:$0x3]
      %301 = vset.pattern.permute.xlu0 0
      %302 = vperm.xlu0 %301, %v295
      %v303 = vpop.permute.xlu0 %302
      %306 = vset.pattern.permute.xlu0 0
      %307 = vperm.xlu0 %306, %v296
      %v308 = vpop.permute.xlu0 %307
      %311 = vset.pattern.permute.xlu0 0
      %312 = vperm.xlu0 %311, %v297
      %v313 = vpop.permute.xlu0 %312
      %316 = vset.pattern.permute.xlu0 0
      %317 = vperm.xlu0 %316, %v298
      %v318 = vpop.permute.xlu0 %317
      %v321 = vperm.slane %v299, 0
      %v322 = vperm.slane %v299, 1
      %v325 = vmul.f32 %v303, %v321
      %v326 = vmul.f32 %v303, %v322
      %v327 = vmul.f32 %v308, %v321
      %v328 = vmul.f32 %v308, %v322
      %v329 = vmul.f32 %v313, %v321
      %v330 = vmul.f32 %v313, %v322
      %v331 = vmul.f32 %v318, %v321
      %v332 = vmul.f32 %v318, %v322
      %v333 = vadd.f32 %v272, %v325
      %v334 = vadd.f32 %v272, %v326
      %v335 = vadd.f32 %v277, %v327
      %v336 = vadd.f32 %v277, %v328
      %v337 = vadd.f32 %v282, %v329
      %v338 = vadd.f32 %v282, %v330
      %v339 = vadd.f32 %v287, %v331
      %v340 = vadd.f32 %v287, %v332
      %s341 = scalar_lea.vmem %s252, 1
      %v342 = vld [vmem:[%s341] ss:$4 sm:$0x3]
      %343 = vset.pattern.permute.xlu0 1
      %344 = vperm.xlu0 %343, %v295
      %v345 = vpop.permute.xlu0 %344
      %347 = vset.pattern.permute.xlu0 1
      %348 = vperm.xlu0 %347, %v296
      %v349 = vpop.permute.xlu0 %348
      %351 = vset.pattern.permute.xlu0 1
      %352 = vperm.xlu0 %351, %v297
      %v353 = vpop.permute.xlu0 %352
      %355 = vset.pattern.permute.xlu0 1
      %356 = vperm.xlu0 %355, %v298
      %v357 = vpop.permute.xlu0 %356
      %v360 = vperm.slane %v342, 0
      %v361 = vperm.slane %v342, 1
      %v364 = vmul.f32 %v345, %v360
      %v365 = vmul.f32 %v345, %v361
      %v366 = vmul.f32 %v349, %v360
      %v367 = vmul.f32 %v349, %v361
      %v368 = vmul.f32 %v353, %v360
      %v369 = vmul.f32 %v353, %v361
      %v370 = vmul.f32 %v357, %v360
      %v371 = vmul.f32 %v357, %v361
      %v372 = vadd.f32 %v333, %v364
      %v373 = vadd.f32 %v334, %v365
      %v374 = vadd.f32 %v335, %v366
      %v375 = vadd.f32 %v336, %v367
      %v376 = vadd.f32 %v337, %v368
      %v377 = vadd.f32 %v338, %v369
      %v378 = vadd.f32 %v339, %v370
      %v379 = vadd.f32 %v340, %v371
      %s380 = scalar_lea.vmem %s252, 2
      %v381 = vld [vmem:[%s380] ss:$4 sm:$0x3]
      %382 = vset.pattern.permute.xlu0 2
      %383 = vperm.xlu0 %382, %v295
      %v384 = vpop.permute.xlu0 %383
      %386 = vset.pattern.permute.xlu0 2
      %387 = vperm.xlu0 %386, %v296
      %v388 = vpop.permute.xlu0 %387
      %390 = vset.pattern.permute.xlu0 2
      %391 = vperm.xlu0 %390, %v297
      %v392 = vpop.permute.xlu0 %391
      %394 = vset.pattern.permute.xlu0 2
      %395 = vperm.xlu0 %394, %v298
      %v396 = vpop.permute.xlu0 %395
      %v399 = vperm.slane %v381, 0
      %v400 = vperm.slane %v381, 1
      %v403 = vmul.f32 %v384, %v399
      %v404 = vmul.f32 %v384, %v400
      %v405 = vmul.f32 %v388, %v399
      %v406 = vmul.f32 %v388, %v400
      %v407 = vmul.f32 %v392, %v399
      %v408 = vmul.f32 %v392, %v400
      %v409 = vmul.f32 %v396, %v399
      %v410 = vmul.f32 %v396, %v400
      %v411 = vadd.f32 %v372, %v403
      %v412 = vadd.f32 %v373, %v404
      %v413 = vadd.f32 %v374, %v405
      %v414 = vadd.f32 %v375, %v406
      %v415 = vadd.f32 %v376, %v407
      %v416 = vadd.f32 %v377, %v408
      %v417 = vadd.f32 %v378, %v409
      %v418 = vadd.f32 %v379, %v410
      %s419 = scalar_lea.vmem %s252, 3
      %v420 = vld [vmem:[%s419] ss:$4 sm:$0x3]
      %421 = vset.pattern.permute.xlu0 3
      %422 = vperm.xlu0 %421, %v295
      %v423 = vpop.permute.xlu0 %422
      %425 = vset.pattern.permute.xlu0 3
      %426 = vperm.xlu0 %425, %v296
      %v427 = vpop.permute.xlu0 %426
      %429 = vset.pattern.permute.xlu0 3
      %430 = vperm.xlu0 %429, %v297
      %v431 = vpop.permute.xlu0 %430
      %433 = vset.pattern.permute.xlu0 3
      %434 = vperm.xlu0 %433, %v298
      %v435 = vpop.permute.xlu0 %434
      %v438 = vperm.slane %v420, 0
      %v439 = vperm.slane %v420, 1
      %v442 = vmul.f32 %v423, %v438
      %v443 = vmul.f32 %v423, %v439
      %v444 = vmul.f32 %v427, %v438
      %v445 = vmul.f32 %v427, %v439
      %v446 = vmul.f32 %v431, %v438
      %v447 = vmul.f32 %v431, %v439
      %v448 = vmul.f32 %v435, %v438
      %v449 = vmul.f32 %v435, %v439
      %v450 = vadd.f32 %v411, %v442
      %v451 = vadd.f32 %v412, %v443
      %v452 = vadd.f32 %v413, %v444
      %v453 = vadd.f32 %v414, %v445
      %v454 = vadd.f32 %v415, %v446
      %v455 = vadd.f32 %v416, %v447
      %v456 = vadd.f32 %v417, %v448
      %v457 = vadd.f32 %v418, %v449
      %v458 = vmax.f32 %v450, 0.0
      %v459 = vmax.f32 %v451, 0.0
      %v460 = vmax.f32 %v452, 0.0
      %v461 = vmax.f32 %v453, 0.0
      %v462 = vmax.f32 %v454, 0.0
      %v463 = vmax.f32 %v455, 0.0
      %v464 = vmax.f32 %v456, 0.0
      %v465 = vmax.f32 %v457, 0.0
      %v466 = vmin.f32 %v458, 6.0
      %v467 = vmin.f32 %v459, 6.0
      %v468 = vmin.f32 %v460, 6.0
      %v469 = vmin.f32 %v461, 6.0
      %v470 = vmin.f32 %v462, 6.0
      %v471 = vmin.f32 %v463, 6.0
      %v472 = vmin.f32 %v464, 6.0
      %v473 = vmin.f32 %v465, 6.0
      %vm474 = vcmask 261120
      %v476 = vsel %vm474, %v264, 0
      %478 = vmatpush.msra.mxu0 0.0
      %479 = vmatpush.msra.mxu0 0.0
      %480 = vmatpush.msra.mxu0 0.0
      %481 = vmatpush.msra.mxu0 0.0
      %482 = vmatpush.msra.mxu0 0.0
      %483 = vmatpush.msra.mxu0 0.0
      %484 = vmatpush.msra.mxu0 0.0
      %485 = vmatpush.msra.mxu0 0.0
      %486 = vmatpush.msra.mxu0 0.0
      %487 = vmatpush.msra.mxu0 0.0
      %488 = vmatpush.msra.mxu0 0.0
      %489 = vmatpush.msra.mxu0 0.0
      %490 = vmatpush.msra.mxu0 %v472
      %491 = vmatpush.msra.mxu0 %v470
      %492 = vmatpush.msra.mxu0 %v468
      %493 = vmatpush.msra.mxu0 %v466
      %494 = vmatmul.f32.gmra.mxu0 %v476
      %v495 = vpop.f32.mrf.mxu0
      %v496 = vadd.f32 %v293, %v495
      %497 = vdwg.mxu0
      %498 = vmatpush.msra.mxu0 0.0
      %499 = vmatpush.msra.mxu0 0.0
      %500 = vmatpush.msra.mxu0 0.0
      %501 = vmatpush.msra.mxu0 0.0
      %502 = vmatpush.msra.mxu0 0.0
      %503 = vmatpush.msra.mxu0 0.0
      %504 = vmatpush.msra.mxu0 0.0
      %505 = vmatpush.msra.mxu0 0.0
      %506 = vmatpush.msra.mxu0 0.0
      %507 = vmatpush.msra.mxu0 0.0
      %508 = vmatpush.msra.mxu0 0.0
      %509 = vmatpush.msra.mxu0 0.0
      %510 = vmatpush.msra.mxu0 %v473
      %511 = vmatpush.msra.mxu0 %v471
      %512 = vmatpush.msra.mxu0 %v469
      %513 = vmatpush.msra.mxu0 %v467
      %514 = vmatmul.f32.gmra.mxu0 %v476
      %v515 = vpop.f32.mrf.mxu0
      %v516 = vadd.f32 %v293, %v515
      %517 = vdwg.mxu0
      %v520 = vrot.slane %v516, 4
      %vm521 = vcmask 1043456
      %v522 = vsel %vm521, %v496, %v520
      %524 = vst [vmem:[%s262] sm:$0xff] %v522
      %s525 = smul.u32 2, %s21
      %p526 = scmp.lt.s32.totalorder %s20, 1
      %s527 = scalar_select %p526, %s20, 1
      %p528 = scmp.lt.s32.totalorder %s525, 1
      %s529 = scalar_select %p528, %s525, 1
      %s530 = smul.addr %s527, 2
      %s531 = sadd.s32 %s529, %s530
      %s532 = smul.addr %s531, 4
      %s533 = scalar_lea.vmem %s5, %s532
      // Predicated region
      $region41: #{mlp_forward.1} parent=39 // pred_check
        %p534 = pneg %p160
      $region42: #{mlp_forward.1} parent=39 // pred_check_branch
        %536 = sbr.rel (%p534) target = $region44
      $region43: #{mlp_forward.1} parent=39 // pred_region
        %s537 = smul.u32 2, %s21
      $region44: #{mlp_forward.1} parent=39 // pred_fallthru
        _
    $region40: #{mlp_forward.1} parent=5 // pred_fallthru
      _
    %p538 = scmp.le.s32.totalorder 2, %s11
    // Predicated region
    $region45: #{mlp_forward.1} parent=5 // pred_check
      %p539 = pneg %p538
    $region46: #{mlp_forward.1} parent=5 // pred_check_branch
      %541 = sbr.rel (%p539) target = $region48
    $region47: #{mlp_forward.1} parent=5 // pred_region
      %s542 = ssub.s32 %s11, 2
      // Predicated region
      $region49: #{mlp_forward.1} parent=47 // pred_check
        %p543 = pneg %p166
      $region50: #{mlp_forward.1} parent=47 // pred_check_branch
        %545 = sbr.rel (%p543) target = $region52
      $region51: #{mlp_forward.1} parent=47 // pred_region
        %s546 = smul.u32 2, %s23
        %p547 = scmp.lt.s32.totalorder %s22, 1
        %s548 = scalar_select %p547, %s22, 1
        %p549 = scmp.lt.s32.totalorder %s546, 1
        %s550 = scalar_select %p549, %s546, 1
        %s551 = smul.addr %s548, 2
        %s552 = sadd.s32 %s550, %s551
        %s553 = smul.addr %s552, 4
        %s554 = scalar_lea.vmem %s5, %s553
      $region52: #{mlp_forward.1} parent=47 // pred_fallthru
        _
    $region48: #{mlp_forward.1} parent=5 // pred_fallthru
      _
  $region6: #{mlp_forward.1} parent=0 // loop_footer
    %s15 = sadd.s32 1, %s11
  $region7: #{mlp_forward.1} parent=0 // loop_footer_branch
    %10 = sbr.rel target = $region3
  $region8: #{mlp_forward.1} parent=0 // loop_exit
    _

</llo_original>
